<compile_context>
chip_gen: v7x
topology: tpu7x:2x2x1
jax: 0.10.0
libtpu: 0.0.40
codegen_flags: <defaults>
</compile_context>

<pallas_src>
import math

import jax
import jax.numpy as jnp
from jax.experimental import pallas as pl
from jax.experimental.pallas import tpu as pltpu

_LANE = 128  # lane width: last-dim tiling unit


def _round_up(x, m):
    return (x + m - 1) // m * m


def _row_unit(dtype):
    # f32 vregs pack (8,128); bf16 (16,128); int8/fp8 (32,128).
    return max(8, 32 // jnp.dtype(dtype).itemsize)


def _pad2d(a, rows, cols):
    pr, pc = rows - a.shape[0], cols - a.shape[1]
    if pr == 0 and pc == 0:
        return a
    return jnp.pad(a, ((0, pr), (0, pc)))


def _vmem_capacity_bytes():
    try:
        cap = int(pltpu.get_tpu_info().vmem_capacity_bytes)
        if cap > 0:
            return cap
    except Exception:
        pass
    return 64 * 1024 * 1024  # conservative: v7x per-TensorCore VMEM


def _default_vmem_budget(cap):
    # v5e/v6e: 128 MiB VMEM -> use ~70%.  v7x: 64 MiB -> ~58%, leaving room
    # for Mosaic internal scratch + output double-buffering.
    if cap >= 96 * 1024 * 1024:
        return int(cap * 0.70)
    return int(cap * 0.58)


def _vmem_limit_bytes(estimate, cap):
    # Only raise the scoped limit when the estimate exceeds every generation's
    # default; never exceed physical VMEM (keep 2 MiB headroom).
    if estimate + (4 << 20) <= (16 << 20):
        return None
    return int(min(max(estimate + (4 << 20), 32 << 20), cap - (2 << 20)))


def _cap_rows_for_megacore(tm, n, row_unit):
    # Keep >= ~4 steps along the parallel row axis when the batch is big
    # enough so v7x's two TensorCores both get work (harmless on v5e/v6e).
    if n >= 4 * row_unit and tm > row_unit:
        tm = min(tm, max(row_unit, _round_up(pl.cdiv(n, 4), row_unit)))
    return tm


def _spec(shape, index_map, buffers=None):
    """BlockSpec with an optional pipeline buffer-count override."""
    if buffers is None:
        return pl.BlockSpec(shape, index_map)
    try:
        return pl.BlockSpec(shape, index_map, pipeline_mode=pl.Buffered(buffers))
    except Exception:
        # Older jax without pipeline_mode / Buffered: fall back to defaults.
        return pl.BlockSpec(shape, index_map)


def _cost_estimate(n, in_p, hid_p, out_p, x_isz, w_isz, out_isz, weight_reads):
    return pl.CostEstimate(
        flops=2 * n * in_p * hid_p + 2 * n * hid_p * out_p,
        transcendentals=0,
        bytes_accessed=int(n * in_p * x_isz
                           + weight_reads * (in_p * hid_p + hid_p * out_p) * w_isz
                           + (hid_p + out_p) * 4
                           + n * out_p * out_isz))


# ---------------------------------------------------------------------------
# Kernels
# ---------------------------------------------------------------------------
def _resident_kernel(x_ref, w1_ref, b1_ref, w2_ref, b2_ref, o_ref):
    # Layer 1: Linear + ReLU.  Cast the streamed x tile to the weight dtype in
    # the kernel (free VPU cast) so MXU operand dtypes are explicit; f32 accum.
    x = x_ref[...].astype(w1_ref.dtype)
    h = jnp.dot(x, w1_ref[...], preferred_element_type=jnp.float32)
    h = jnp.maximum(h + b1_ref[...], 0.0)
    # Layer 2: Linear + ReLU.
    y = jnp.dot(h.astype(w2_ref.dtype), w2_ref[...],
                preferred_element_type=jnp.float32)
    y = jnp.maximum(y + b2_ref[...], 0.0)
    # Dropout(p=0.0) == identity.
    o_ref[...] = y.astype(o_ref.dtype)


def _streamed_kernel(x_ref, w1_ref, b1_ref, w2_ref, b2_ref, o_ref, acc_ref):
    # Hidden-dim (layer-1 N / layer-2 K) tiled variant for weights too large
    # to keep resident.  Grid axis 1 walks hidden chunks; acc_ref carries the
    # f32 partial sums of layer 2.
    j = pl.program_id(1)

    @pl.when(j == 0)
    def _():
        acc_ref[...] = jnp.zeros_like(acc_ref)

    x = x_ref[...].astype(w1_ref.dtype)
    h = jnp.dot(x, w1_ref[...], preferred_element_type=jnp.float32)
    h = jnp.maximum(h + b1_ref[...], 0.0)
    acc_ref[...] += jnp.dot(h.astype(w2_ref.dtype), w2_ref[...],
                            preferred_element_type=jnp.float32)

    @pl.when(j == pl.num_programs(1) - 1)
    def _():
        y = jnp.maximum(acc_ref[...] + b2_ref[...], 0.0)
        # Dropout(p=0.0) == identity.
        o_ref[...] = y.astype(o_ref.dtype)


# ---------------------------------------------------------------------------
# Tile selection
# ---------------------------------------------------------------------------
def _select_resident_rows(req_rows, in_p, out_p, row_unit,
                          x_isz, w_isz, out_isz, x_buffers, budget):
    """Largest row tile keeping SINGLE-buffered resident weights + streamed
    x/out tiles + the f32 intermediate under `budget`."""
    resident = (in_p * out_p + out_p * out_p) * w_isz + 2 * out_p * 4
    per_row = (x_buffers * in_p * x_isz      # buffered x tile
               + 2 * out_p * out_isz         # double-buffered out tile
               + out_p * 4                   # f32 intermediate h
               + out_p * w_isz)              # h cast for the 2nd matmul
    avail = budget - resident
    tm_cap = (avail // per_row) // row_unit * row_unit if avail > 0 else 0
    tm = min(req_rows, max(tm_cap, 0))
    return tm, resident, per_row


def _select_streamed_tiles(req_rows, in_p, out_p, row_unit,
                           x_isz, w_isz, out_isz, x_buffers, budget):
    """Row tile + hidden-dim chunk size for the weight-streaming path."""
    tm = max(row_unit, req_rows)
    while True:
        fixed = (tm * out_p * 4                   # f32 accumulator (scratch)
                 + x_buffers * tm * in_p * x_isz  # buffered x tile
                 + 2 * tm * out_p * out_isz       # double-buffered out tile
                 + out_p * 4)                     # b2 (single-buffered)
        per_col = (2 * in_p * w_isz               # w1 chunk (double-buffered)
                   + 2 * out_p * w_isz            # w2 chunk (double-buffered)
                   + 2 * 4                        # b1 chunk
                   + tm * 4 + tm * w_isz)         # h chunk f32 + cast copy
        avail = budget - fixed
        tk = (avail // per_col) // _LANE * _LANE if avail > 0 else 0
        if tk >= _LANE or tm <= row_unit:
            break
        tm = max(row_unit, (tm // 2) // row_unit * row_unit)
    tk = int(max(_LANE, min(tk, 1024, _round_up(out_p, _LANE))))
    return tm, tk, fixed, per_col


# ---------------------------------------------------------------------------
# Wrapper
# ---------------------------------------------------------------------------
def double_linear_block(x, w1, b1, w2, b2, *,
                        block_rows=512,
                        compute_dtype=None,
                        weights_resident=None,
                        hidden_block_cols=None,
                        x_buffer_count=2,
                        vmem_budget_bytes=None):
    """x: [N, in_f], w1: [in_f, out_f], b1: [out_f], w2: [out_f, out_f],
    b2: [out_f]  ->  [N, out_f].  compute_dtype=jnp.bfloat16 runs the MXU at
    full rate (f32 accumulation, f32 bias/ReLU epilogue)."""
    n, in_f = x.shape
    out_f = w1.shape[1]
    out_dtype = x.dtype
    row_unit = _row_unit(out_dtype)

    cap = _vmem_capacity_bytes()
    budget = (_default_vmem_budget(cap) if vmem_budget_bytes is None
              else int(vmem_budget_bytes))

    # Biases / epilogue in f32.
    b1 = b1.reshape(1, -1).astype(jnp.float32)
    b2 = b2.reshape(1, -1).astype(jnp.float32)

    # Weights are read once (or in coarse chunks), so casting them in the
    # wrapper is cheap.  x is streamed and cast inside the kernel instead.
    if compute_dtype is not None:
        w1 = w1.astype(compute_dtype)
        w2 = w2.astype(compute_dtype)

    in_p = _round_up(in_f, _LANE)
    out_p = _round_up(out_f, _LANE)

    x_isz = jnp.dtype(x.dtype).itemsize
    w_isz = jnp.dtype(w1.dtype).itemsize
    out_isz = jnp.dtype(out_dtype).itemsize

    # Pad feature axes only (exact for Linear+ReLU); rows stay ragged so no
    # extra HBM pass over the activations when shapes are already aligned.
    xp = _pad2d(x, n, in_p)
    w1p = _pad2d(w1, in_p, out_p)
    b1p = _pad2d(b1, 1, out_p)
    w2p = _pad2d(w2, out_p, out_p)
    b2p = _pad2d(b2, 1, out_p)

    req_rows = min(_round_up(max(block_rows, 1), row_unit),
                   _round_up(n, row_unit))
    req_rows = _cap_rows_for_megacore(req_rows, n, row_unit)

    tm_res, resident_bytes, per_row = _select_resident_rows(
        req_rows, in_p, out_p, row_unit, x_isz, w_isz, out_isz,
        x_buffer_count, budget)

    if weights_resident is None:
        # Resident only if the single-buffered weights still leave room for a
        # reasonable row tile; otherwise stream weight chunks instead.
        weights_resident = tm_res >= min(_round_up(n, row_unit), 8 * row_unit)

    if weights_resident:
        tm = max(row_unit, tm_res)
        grid = (pl.cdiv(n, tm),)
        vmem_estimate = resident_bytes + tm * per_row
        cost = _cost_estimate(n, in_p, out_p, out_p, x_isz, w_isz, out_isz, 1)
        out = pl.pallas_call(
            _resident_kernel,
            out_shape=jax.ShapeDtypeStruct((n, out_p), out_dtype),
            grid_spec=pltpu.PrefetchScalarGridSpec(
                num_scalar_prefetch=0,
                grid=grid,
                in_specs=[
                    # Streamed row tiles of x (sweep x_buffer_count=3 if the
                    # DMA is exposed on low-bandwidth parts).
                    _spec((tm, in_p), lambda i: (i, 0), x_buffer_count),
                    # Weights/biases: constant block index -> single-buffered,
                    # DMA'd once, resident in VMEM for the whole grid.
                    _spec((in_p, out_p), lambda i: (0, 0), 1),
                    _spec((1, out_p), lambda i: (0, 0), 1),
                    _spec((out_p, out_p), lambda i: (0, 0), 1),
                    _spec((1, out_p), lambda i: (0, 0), 1),
                ],
                out_specs=pl.BlockSpec((tm, out_p), lambda i: (i, 0)),
            ),
            compiler_params=pltpu.CompilerParams(
                dimension_semantics=("parallel",),
                vmem_limit_bytes=_vmem_limit_bytes(vmem_estimate, cap)),
            cost_estimate=cost,
        )(xp, w1p, b1p, w2p, b2p)
    else:
        tm, tk, fixed, per_col = _select_streamed_tiles(
            req_rows, in_p, out_p, row_unit, x_isz, w_isz, out_isz,
            x_buffer_count, budget)
        if hidden_block_cols is not None:
            tk = max(_LANE, min(tk, _round_up(int(hidden_block_cols), _LANE)))
        hid_p = _round_up(out_p, tk)
        # Pad the hidden axis (layer-1 N / layer-2 K) to a tk multiple; zero
        # padding is exact (ReLU(0 + 0) = 0 rows contribute nothing).
        w1p = _pad2d(w1p, in_p, hid_p)
        b1p = _pad2d(b1p, 1, hid_p)
        w2p = _pad2d(w2p, hid_p, out_p)
        grid = (pl.cdiv(n, tm), hid_p // tk)
        vmem_estimate = fixed + tk * per_col
        cost = _cost_estimate(n, in_p, hid_p, out_p, x_isz, w_isz, out_isz,
                              grid[0])
        # TODO(synk): if even the streamed tiles overflow VMEM (astronomical
        # out_f), fall back to plain XLA matmuls instead of this kernel.
        out = pl.pallas_call(
            _streamed_kernel,
            out_shape=jax.ShapeDtypeStruct((n, out_p), out_dtype),
            grid_spec=pltpu.PrefetchScalarGridSpec(
                num_scalar_prefetch=0,
                grid=grid,
                in_specs=[
                    _spec((tm, in_p), lambda i, j: (i, 0), x_buffer_count),
                    _spec((in_p, tk), lambda i, j: (0, j)),
                    _spec((1, tk), lambda i, j: (0, j)),
                    _spec((tk, out_p), lambda i, j: (j, 0)),
                    _spec((1, out_p), lambda i, j: (0, 0), 1),
                ],
                out_specs=pl.BlockSpec((tm, out_p), lambda i, j: (i, 0)),
                scratch_shapes=[pltpu.VMEM((tm, out_p), jnp.float32)],
            ),
            compiler_params=pltpu.CompilerParams(
                dimension_semantics=("parallel", "arbitrary"),
                vmem_limit_bytes=_vmem_limit_bytes(vmem_estimate, cap)),
            cost_estimate=cost,
        )(xp, w1p, b1p, w2p, b2p)

    if out_p != out_f:
        out = out[:, :out_f]
    return out


# ---------------------------------------------------------------------------
# Reference / init / tests
# ---------------------------------------------------------------------------
def init_params(key, in_features, out_features, dtype=jnp.float32):
    """Deterministic init mimicking nn.Linear's uniform(-1/sqrt(fan_in), ...)."""
    k1, k2, k3, k4 = jax.random.split(key, 4)
    bound1 = 1.0 / math.sqrt(in_features)
    bound2 = 1.0 / math.sqrt(out_features)
    w1 = jax.random.uniform(k1, (in_features, out_features), dtype,
                            minval=-bound1, maxval=bound1)
    b1 = jax.random.uniform(k2, (out_features,), dtype,
                            minval=-bound1, maxval=bound1)
    w2 = jax.random.uniform(k3, (out_features, out_features), dtype,
                            minval=-bound2, maxval=bound2)
    b2 = jax.random.uniform(k4, (out_features,), dtype,
                            minval=-bound2, maxval=bound2)
    return w1, b1, w2, b2


def _reference(x, w1, b1, w2, b2):
    h = jnp.maximum(x @ w1 + b1.reshape(1, -1), 0.0)
    return jnp.maximum(h @ w2 + b2.reshape(1, -1), 0.0)


if __name__ == "__main__":
    key = jax.random.PRNGKey(0)
    k_x1, k_p1, k_x2, k_p2 = jax.random.split(key, 4)

    # Case 1: small, lane-unaligned shapes + ragged row tail (exercises the
    # feature-axis zero padding and the partial last row block).
    batch, in_f, out_f = 27, 16, 32
    x1 = jax.random.normal(k_x1, (batch, in_f), jnp.float32)
    w1, b1, w2, b2 = init_params(k_p1, in_f, out_f)
    out1 = jax.block_until_ready(double_linear_block(x1, w1, b1, w2, b2))
    assert out1.shape == (batch, out_f)
    assert jnp.allclose(out1, _reference(x1, w1, b1, w2, b2),
                        atol=1e-5, rtol=1e-5)

    # Case 2: lane-aligned, multi-step row grid over resident weights.
    batch, in_f, out_f = 256, 128, 256
    x2 = jax.random.normal(k_x2, (batch, in_f), jnp.float32)
    w1, b1, w2, b2 = init_params(k_p2, in_f, out_f)
    ref2 = _reference(x2, w1, b1, w2, b2)
    out2 = jax.block_until_ready(double_linear_block(x2, w1, b1, w2, b2))
    assert out2.shape == (batch, out_f)
    assert jnp.allclose(out2, ref2, atol=1e-4, rtol=1e-4)

    # Case 3: bf16 MXU operands (in-kernel x cast) with f32 accumulation.
    out3 = jax.block_until_ready(
        double_linear_block(x2, w1, b1, w2, b2, compute_dtype=jnp.bfloat16))
    assert out3.shape == (batch, out_f)
    assert jnp.allclose(out3, ref2, atol=1e-1, rtol=1e-1)

    # Case 4: forced weight-streaming (hidden-dim tiled) path used when the
    # weights do not fit VMEM; verifies the f32 accumulator across chunks.
    out4 = jax.block_until_ready(
        double_linear_block(x2, w1, b1, w2, b2,
                            weights_resident=False, hidden_block_cols=128))
    assert out4.shape == (batch, out_f)
    assert jnp.allclose(out4, ref2, atol=1e-4, rtol=1e-4)

    print("KERNEL_OK")
</pallas_src>

<mosaic_0001>
module attributes {stable_mosaic.version = 11 : i64} {
  func.func @_resident_kernel(%arg0: i32, %arg1: memref<32x128xf32, #tpu.memory_space<vmem>>, %arg2: memref<128x128xf32, #tpu.memory_space<vmem>>, %arg3: memref<1x128xf32, #tpu.memory_space<vmem>>, %arg4: memref<128x128xf32, #tpu.memory_space<vmem>>, %arg5: memref<1x128xf32, #tpu.memory_space<vmem>>, %arg6: memref<32x128xf32, #tpu.memory_space<vmem>>) attributes {dimension_semantics = [#tpu.dimension_semantics<parallel>], iteration_bounds = array<i64: 1>, scalar_prefetch = 0 : i64, scratch_operands = 0 : i64, tpu.core_type = #tpu.core_type<tc>, window_params = [{pipeline_mode = #tpu.pipeline_mode<double_buffered>, transform_indices = @transform_0, window_bounds = array<i64: 32, 128>}, {pipeline_mode = #tpu.pipeline_mode<synchronous>, transform_indices = @transform_1, window_bounds = array<i64: 128, 128>}, {pipeline_mode = #tpu.pipeline_mode<synchronous>, transform_indices = @transform_2, window_bounds = array<i64: 1, 128>}, {pipeline_mode = #tpu.pipeline_mode<synchronous>, transform_indices = @transform_3, window_bounds = array<i64: 128, 128>}, {pipeline_mode = #tpu.pipeline_mode<synchronous>, transform_indices = @transform_4, window_bounds = array<i64: 1, 128>}, {transform_indices = @transform_5, window_bounds = array<i64: 32, 128>}]} {
    %c0 = arith.constant 0 : index
    %c0_0 = arith.constant 0 : index
    %0 = vector.load %arg1[%c0, %c0_0] : memref<32x128xf32, #tpu.memory_space<vmem>>, vector<32x128xf32>
    %c0_1 = arith.constant 0 : index
    %c0_2 = arith.constant 0 : index
    %1 = vector.load %arg2[%c0_1, %c0_2] : memref<128x128xf32, #tpu.memory_space<vmem>>, vector<128x128xf32>
    %cst = arith.constant dense<0.000000e+00> : vector<32x128xf32>
    %2 = tpu.matmul %0, %1, %cst {dimension_numbers = #tpu.dot_dimension_numbers<[1], [0], [0], [1], [0, 0, 1, 1], [], []>} : vector<32x128xf32>, vector<128x128xf32>, vector<32x128xf32> -> vector<32x128xf32>
    %c0_3 = arith.constant 0 : index
    %c0_4 = arith.constant 0 : index
    %3 = vector.load %arg3[%c0_3, %c0_4] : memref<1x128xf32, #tpu.memory_space<vmem>>, vector<1x128xf32>
    %4 = vector.broadcast %3 : vector<1x128xf32> to vector<32x128xf32>
    %5 = arith.addf %2, %4 : vector<32x128xf32>
    %cst_5 = arith.constant 0.000000e+00 : f32
    %6 = vector.broadcast %cst_5 : f32 to vector<32x128xf32>
    %7 = arith.maximumf %5, %6 : vector<32x128xf32>
    %c0_6 = arith.constant 0 : index
    %c0_7 = arith.constant 0 : index
    %8 = vector.load %arg4[%c0_6, %c0_7] : memref<128x128xf32, #tpu.memory_space<vmem>>, vector<128x128xf32>
    %cst_8 = arith.constant dense<0.000000e+00> : vector<32x128xf32>
    %9 = tpu.matmul %7, %8, %cst_8 {dimension_numbers = #tpu.dot_dimension_numbers<[1], [0], [0], [1], [0, 0, 1, 1], [], []>} : vector<32x128xf32>, vector<128x128xf32>, vector<32x128xf32> -> vector<32x128xf32>
    %c0_9 = arith.constant 0 : index
    %c0_10 = arith.constant 0 : index
    %10 = vector.load %arg5[%c0_9, %c0_10] : memref<1x128xf32, #tpu.memory_space<vmem>>, vector<1x128xf32>
    %11 = vector.broadcast %10 : vector<1x128xf32> to vector<32x128xf32>
    %12 = arith.addf %9, %11 : vector<32x128xf32>
    %cst_11 = arith.constant 0.000000e+00 : f32
    %13 = vector.broadcast %cst_11 : f32 to vector<32x128xf32>
    %14 = arith.maximumf %12, %13 : vector<32x128xf32>
    %c0_12 = arith.constant 0 : index
    %c0_13 = arith.constant 0 : index
    %15 = vector.load %arg6[%c0_12, %c0_13] : memref<32x128xf32, #tpu.memory_space<vmem>>, vector<32x128xf32>
    tpu.vector_store %arg6[%c0_12, %c0_13], %14 {strides = array<i32>} : memref<32x128xf32, #tpu.memory_space<vmem>>, vector<32x128xf32>,
    return
  }
  func.func @transform_0(%arg0: i32) -> (i32, i32) {
    %c0_i32 = arith.constant 0 : i32
    %c0_i32_0 = arith.constant 0 : i32
    return %arg0, %c0_i32 : i32, i32
  }
  func.func @transform_1(%arg0: i32) -> (i32, i32) {
    %c0_i32 = arith.constant 0 : i32
    %c0_i32_0 = arith.constant 0 : i32
    %c0_i32_1 = arith.constant 0 : i32
    return %c0_i32, %c0_i32_0 : i32, i32
  }
  func.func @transform_2(%arg0: i32) -> (i32, i32) {
    %c0_i32 = arith.constant 0 : i32
    %c0_i32_0 = arith.constant 0 : i32
    %c0_i32_1 = arith.constant 0 : i32
    return %c0_i32, %c0_i32_0 : i32, i32
  }
  func.func @transform_3(%arg0: i32) -> (i32, i32) {
    %c0_i32 = arith.constant 0 : i32
    %c0_i32_0 = arith.constant 0 : i32
    %c0_i32_1 = arith.constant 0 : i32
    return %c0_i32, %c0_i32_0 : i32, i32
  }
  func.func @transform_4(%arg0: i32) -> (i32, i32) {
    %c0_i32 = arith.constant 0 : i32
    %c0_i32_0 = arith.constant 0 : i32
    %c0_i32_1 = arith.constant 0 : i32
    return %c0_i32, %c0_i32_0 : i32, i32
  }
  func.func @transform_5(%arg0: i32) -> (i32, i32) {
    %c0_i32 = arith.constant 0 : i32
    %c0_i32_0 = arith.constant 0 : i32
    return %arg0, %c0_i32 : i32, i32
  }
}

</mosaic_0001>

<llo_original>
// kernel: tpu_custom_call.1
$region0: #{tpu_custom_call.1}
  #allocation0 [shape = 'u32[]', space=smem, size = 0x4, offset = 0x4, fixed_abs, tag = 'smem constant byte address 0x4 - core index']
  #allocation1 [shape = 'u32[144,128]{1,0:T(1,128)}', space=vmem, size = 0x12000, scoped, tag = 'internal scratch']
  %s0 = inlined_call_operand.hbm [shape: f32[27,128], index: 0, kind: input, shape index: {}]
  %s1 = inlined_call_operand.hbm [shape: f32[128,128], index: 1, kind: input, shape index: {}]
  %s2 = inlined_call_operand.vmem [shape: f32[1,128], index: 2, kind: input, shape index: {}]
  %s3 = inlined_call_operand.hbm [shape: f32[128,128], index: 3, kind: input, shape index: {}]
  %s4 = inlined_call_operand.vmem [shape: f32[1,128], index: 4, kind: input, shape index: {}]
  %s5 = inlined_call_operand.hbm [shape: f32[27,128], index: 5, kind: output, shape index: {}]
  %s6 = sld [smem:[#allocation0]]
  $region42: #{tpu_custom_call.1} parent=0
    _
  %s8 = ssub.s32 1, %s6
  %s9 = scalar_select 0, %s8, %s6
  $region1: #{tpu_custom_call.1} parent=0
    #allocation2 [shape = 'u8[16384]{0}', space=vmem, size = 0x4000, scoped, tag = 'input window, operand 0, single buffered']
    #allocation3 [shape = 's32[1]{0}', space=sflag, size = 0x4, scoped, tag = 'scoped memory for tpu_custom_call.1']
    #allocation4 [shape = 's32[1]{0}', space=sflag, size = 0x4, scoped, tag = 'scoped memory for tpu_custom_call.1']
    #allocation5 [shape = 'u8[65536]{0}', space=vmem, size = 0x10000, scoped, tag = 'input window, operand 1, single buffered']
    #allocation6 [shape = 's32[1]{0}', space=sflag, size = 0x4, scoped, tag = 'scoped memory for tpu_custom_call.1']
    #allocation7 [shape = 'u8[65536]{0}', space=vmem, size = 0x10000, scoped, tag = 'input window, operand 3, single buffered']
    #allocation8 [shape = 'u8[16384]{0}', space=vmem, size = 0x4000, scoped, tag = 'output window, operand 0, single buffered']
    %10 = vsyncpa [#allocation3], 0
    %11 = vsyncpa [#allocation6], 0
    %12 = vsyncpa [#allocation4], 0
    // Predicated region
    $region2: #{tpu_custom_call.1} parent=1 // pred_check
      _
    $region3: #{tpu_custom_call.1} parent=1 // pred_check_branch
      %14 = sbr.rel (0) target = $region5
    $region4: #{tpu_custom_call.1} parent=1 // pred_region
      %s16 = ssub.s32 512, 512
      %17 = vsyncadd [#allocation3], %s16
      %s18 = sshll.u32 [#allocation2], 4
      %s19 = int_to_ptr.vmem [resolvable:$true] %s18
      %24 = dma.hbm_to_vmem [thread:$0]  %s0, 512, %s19, [#allocation3], 128, 128, 8
    $region5: #{tpu_custom_call.1} parent=1 // pred_fallthru
      _
    // Predicated region
    $region6: #{tpu_custom_call.1} parent=1 // pred_check
      _
    $region7: #{tpu_custom_call.1} parent=1 // pred_check_branch
      %26 = sbr.rel (0) target = $region9
    $region8: #{tpu_custom_call.1} parent=1 // pred_region
      %s28 = ssub.s32 2048, 2048
      %29 = vsyncadd [#allocation6], %s28
      %s30 = sshll.u32 [#allocation5], 4
      %s31 = int_to_ptr.vmem [resolvable:$true] %s30
      %36 = dma.hbm_to_vmem [thread:$0]  %s1, 2048, %s31, [#allocation6], 128, 128, 8
    $region9: #{tpu_custom_call.1} parent=1 // pred_fallthru
      _
    // Predicated region
    $region10: #{tpu_custom_call.1} parent=1 // pred_check
      _
    $region11: #{tpu_custom_call.1} parent=1 // pred_check_branch
      %38 = sbr.rel (0) target = $region13
    $region12: #{tpu_custom_call.1} parent=1 // pred_region
      _
    $region13: #{tpu_custom_call.1} parent=1 // pred_fallthru
      _
    // Predicated region
    $region14: #{tpu_custom_call.1} parent=1 // pred_check
      _
    $region15: #{tpu_custom_call.1} parent=1 // pred_check_branch
      %40 = sbr.rel (0) target = $region17
    $region16: #{tpu_custom_call.1} parent=1 // pred_region
      %s42 = ssub.s32 2048, 2048
      %43 = vsyncadd [#allocation6], %s42
      %s44 = sshll.u32 [#allocation7], 4
      %s45 = int_to_ptr.vmem [resolvable:$true] %s44
      %50 = dma.hbm_to_vmem [thread:$0]  %s3, 2048, %s45, [#allocation6], 128, 128, 8
    $region17: #{tpu_custom_call.1} parent=1 // pred_fallthru
      _
    // Predicated region
    $region18: #{tpu_custom_call.1} parent=1 // pred_check
      _
    $region19: #{tpu_custom_call.1} parent=1 // pred_check_branch
      %52 = sbr.rel (0) target = $region21
    $region20: #{tpu_custom_call.1} parent=1 // pred_region
      _
    $region21: #{tpu_custom_call.1} parent=1 // pred_fallthru
      _
    // Predicated region
    $region22: #{tpu_custom_call.1} parent=1 // pred_check
      _
    $region23: #{tpu_custom_call.1} parent=1 // pred_check_branch
      %54 = sbr.rel (0) target = $region25
    $region24: #{tpu_custom_call.1} parent=1 // pred_region
      %55 = dma.done [#allocation3], 512
    $region25: #{tpu_custom_call.1} parent=1 // pred_fallthru
      _
    // Predicated region
    $region26: #{tpu_custom_call.1} parent=1 // pred_check
      _
    $region27: #{tpu_custom_call.1} parent=1 // pred_check_branch
      %57 = sbr.rel (0) target = $region29
    $region28: #{tpu_custom_call.1} parent=1 // pred_region
      %58 = dma.done [#allocation6], 2048
    $region29: #{tpu_custom_call.1} parent=1 // pred_fallthru
      _
    // Predicated region
    $region30: #{tpu_custom_call.1} parent=1 // pred_check
      _
    $region31: #{tpu_custom_call.1} parent=1 // pred_check_branch
      %60 = sbr.rel (0) target = $region33
    $region32: #{tpu_custom_call.1} parent=1 // pred_region
      %61 = dma.done [#allocation6], 2048
    $region33: #{tpu_custom_call.1} parent=1 // pred_fallthru
      _
    %v62 = vld [vmem:[#allocation2] sm:$0xff]
    %v63 = vld [vmem:[#allocation2 + $0x8] sm:$0xff]
    %v64 = vld [vmem:[#allocation2 + $0x10] sm:$0xff]
    %v65 = vld [vmem:[#allocation2 + $0x18] sm:$0xff]
    %v66 = vld [vmem:[#allocation5] sm:$0xff]
    %v67 = vld [vmem:[#allocation5 + $0x8] sm:$0xff]
    %v68 = vld [vmem:[#allocation5 + $0x10] sm:$0xff]
    %v69 = vld [vmem:[#allocation5 + $0x18] sm:$0xff]
    %v70 = vld [vmem:[#allocation5 + $0x20] sm:$0xff]
    %v71 = vld [vmem:[#allocation5 + $0x28] sm:$0xff]
    %v72 = vld [vmem:[#allocation5 + $0x30] sm:$0xff]
    %v73 = vld [vmem:[#allocation5 + $0x38] sm:$0xff]
    %v74 = vld [vmem:[#allocation5 + $0x40] sm:$0xff]
    %v75 = vld [vmem:[#allocation5 + $0x48] sm:$0xff]
    %v76 = vld [vmem:[#allocation5 + $0x50] sm:$0xff]
    %v77 = vld [vmem:[#allocation5 + $0x58] sm:$0xff]
    %v78 = vld [vmem:[#allocation5 + $0x60] sm:$0xff]
    %v79 = vld [vmem:[#allocation5 + $0x68] sm:$0xff]
    %v80 = vld [vmem:[#allocation5 + $0x70] sm:$0xff]
    %v81 = vld [vmem:[#allocation5 + $0x78] sm:$0xff]
    %v82 = vld [vmem:[%s2] sm:$0x1]
    %v84 = vlaneseq
    %v85 = vshrl.u32 %v84, 7
    %v86 = vsub.s32 0, %v85
    %v87 = vrot.slane %v82, %v86
    %89 = vmatprep.subr.mxu0 0.0
    %90 = vmatpush1.msra.mxu0 %v66
    %91 = vmatprep.subr.mxu0 0.0
    %92 = vmatpush1.msra.mxu0 %v67
    %93 = vmatprep.subr.mxu0 0.0
    %94 = vmatpush1.msra.mxu0 %v68
    %95 = vmatprep.subr.mxu0 0.0
    %96 = vmatpush1.msra.mxu0 %v69
    %97 = vmatprep.subr.mxu0 0.0
    %98 = vmatpush1.msra.mxu0 %v70
    %99 = vmatprep.subr.mxu0 0.0
    %100 = vmatpush1.msra.mxu0 %v71
    %101 = vmatprep.subr.mxu0 0.0
    %102 = vmatpush1.msra.mxu0 %v72
    %103 = vmatprep.subr.mxu0 0.0
    %104 = vmatpush1.msra.mxu0 %v73
    %105 = vmatprep.subr.mxu0 0.0
    %106 = vmatpush1.msra.mxu0 %v74
    %107 = vmatprep.subr.mxu0 0.0
    %108 = vmatpush1.msra.mxu0 %v75
    %109 = vmatprep.subr.mxu0 0.0
    %110 = vmatpush1.msra.mxu0 %v76
    %111 = vmatprep.subr.mxu0 0.0
    %112 = vmatpush1.msra.mxu0 %v77
    %113 = vmatprep.subr.mxu0 0.0
    %114 = vmatpush1.msra.mxu0 %v78
    %115 = vmatprep.subr.mxu0 0.0
    %116 = vmatpush1.msra.mxu0 %v79
    %117 = vmatprep.subr.mxu0 0.0
    %118 = vmatpush1.msra.mxu0 %v80
    %119 = vmatprep.subr.mxu0 0.0
    %120 = vmatpush1.msra.mxu0 %v81
    %121 = vmatprep.subr.mxu0 0.0
    %122 = vmatpush1.msra.mxu0 0.0
    %123 = vmatprep.subr.mxu0 0.0
    %124 = vmatpush1.msra.mxu0 0.0
    %125 = vmatprep.subr.mxu0 0.0
    %126 = vmatpush1.msra.mxu0 0.0
    %127 = vmatprep.subr.mxu0 0.0
    %128 = vmatpush1.msra.mxu0 0.0
    %129 = vmatprep.subr.mxu0 0.0
    %130 = vmatpush1.msra.mxu0 0.0
    %131 = vmatprep.subr.mxu0 0.0
    %132 = vmatpush1.msra.mxu0 0.0
    %133 = vmatprep.subr.mxu0 0.0
    %134 = vmatpush1.msra.mxu0 0.0
    %135 = vmatprep.subr.mxu0 0.0
    %136 = vmatpush1.msra.mxu0 0.0
    %137 = vmatprep.subr.mxu0 0.0
    %138 = vmatpush1.msra.mxu0 0.0
    %139 = vmatprep.subr.mxu0 0.0
    %140 = vmatpush1.msra.mxu0 0.0
    %141 = vmatprep.subr.mxu0 0.0
    %142 = vmatpush1.msra.mxu0 0.0
    %143 = vmatprep.subr.mxu0 0.0
    %144 = vmatpush1.msra.mxu0 0.0
    %145 = vmatprep.subr.mxu0 0.0
    %146 = vmatpush1.msra.mxu0 0.0
    %147 = vmatprep.subr.mxu0 0.0
    %148 = vmatpush1.msra.mxu0 0.0
    %149 = vmatprep.subr.mxu0 0.0
    %150 = vmatpush1.msra.mxu0 0.0
    %151 = vmatprep.subr.mxu0 0.0
    %152 = vmatpush1.msra.mxu0 0.0
    %153 = vmatprep.mubr.f32.mxu0 0.0
    %154 = vmatmul.mubr.f32.gmra.mrb[0].mxu0 %v62
    %v155 = vpop.f32.mrb[0].mxu0
    %v156 = vadd.f32 %v87, %v155
    %v157 = vpop.f32.mrb[0].mxu0
    %158 = vmatprep.mubr.f32.mxu0 0.0
    %159 = vmatmul.mubr.f32.gmra.mrb[0].mxu0 %v63
    %v160 = vpop.f32.mrb[0].mxu0
    %v161 = vadd.f32 %v87, %v160
    %v162 = vpop.f32.mrb[0].mxu0
    %163 = vmatprep.mubr.f32.mxu0 0.0
    %164 = vmatmul.mubr.f32.gmra.mrb[0].mxu0 %v64
    %v165 = vpop.f32.mrb[0].mxu0
    %v166 = vadd.f32 %v87, %v165
    %v167 = vpop.f32.mrb[0].mxu0
    %168 = vmatprep.mubr.f32.mxu0 0.0
    %169 = vmatmul.mubr.f32.gmra.mrb[0].mxu0 %v65
    %v170 = vpop.f32.mrb[0].mxu0
    %v171 = vadd.f32 %v87, %v170
    %v172 = vpop.f32.mrb[0].mxu0
    %173 = vdwg.mxu0
    %v174 = vmax.f32 %v156, 0.0
    %v175 = vmax.f32 %v161, 0.0
    %v176 = vmax.f32 %v166, 0.0
    %v177 = vmax.f32 %v171, 0.0
    %v178 = vld [vmem:[#allocation7] sm:$0xff]
    %v179 = vld [vmem:[#allocation7 + $0x8] sm:$0xff]
    %v180 = vld [vmem:[#allocation7 + $0x10] sm:$0xff]
    %v181 = vld [vmem:[#allocation7 + $0x18] sm:$0xff]
    %v182 = vld [vmem:[#allocation7 + $0x20] sm:$0xff]
    %v183 = vld [vmem:[#allocation7 + $0x28] sm:$0xff]
    %v184 = vld [vmem:[#allocation7 + $0x30] sm:$0xff]
    %v185 = vld [vmem:[#allocation7 + $0x38] sm:$0xff]
    %v186 = vld [vmem:[#allocation7 + $0x40] sm:$0xff]
    %v187 = vld [vmem:[#allocation7 + $0x48] sm:$0xff]
    %v188 = vld [vmem:[#allocation7 + $0x50] sm:$0xff]
    %v189 = vld [vmem:[#allocation7 + $0x58] sm:$0xff]
    %v190 = vld [vmem:[#allocation7 + $0x60] sm:$0xff]
    %v191 = vld [vmem:[#allocation7 + $0x68] sm:$0xff]
    %v192 = vld [vmem:[#allocation7 + $0x70] sm:$0xff]
    %v193 = vld [vmem:[#allocation7 + $0x78] sm:$0xff]
    %v194 = vld [vmem:[%s4] sm:$0x1]
    %v196 = vlaneseq
    %v197 = vshrl.u32 %v196, 7
    %v198 = vsub.s32 0, %v197
    %v199 = vrot.slane %v194, %v198
    %201 = vmatprep.subr.mxu0 0.0
    %202 = vmatpush1.msra.mxu0 %v178
    %203 = vmatprep.subr.mxu0 0.0
    %204 = vmatpush1.msra.mxu0 %v179
    %205 = vmatprep.subr.mxu0 0.0
    %206 = vmatpush1.msra.mxu0 %v180
    %207 = vmatprep.subr.mxu0 0.0
    %208 = vmatpush1.msra.mxu0 %v181
    %209 = vmatprep.subr.mxu0 0.0
    %210 = vmatpush1.msra.mxu0 %v182
    %211 = vmatprep.subr.mxu0 0.0
    %212 = vmatpush1.msra.mxu0 %v183
    %213 = vmatprep.subr.mxu0 0.0
    %214 = vmatpush1.msra.mxu0 %v184
    %215 = vmatprep.subr.mxu0 0.0
    %216 = vmatpush1.msra.mxu0 %v185
    %217 = vmatprep.subr.mxu0 0.0
    %218 = vmatpush1.msra.mxu0 %v186
    %219 = vmatprep.subr.mxu0 0.0
    %220 = vmatpush1.msra.mxu0 %v187
    %221 = vmatprep.subr.mxu0 0.0
    %222 = vmatpush1.msra.mxu0 %v188
    %223 = vmatprep.subr.mxu0 0.0
    %224 = vmatpush1.msra.mxu0 %v189
    %225 = vmatprep.subr.mxu0 0.0
    %226 = vmatpush1.msra.mxu0 %v190
    %227 = vmatprep.subr.mxu0 0.0
    %228 = vmatpush1.msra.mxu0 %v191
    %229 = vmatprep.subr.mxu0 0.0
    %230 = vmatpush1.msra.mxu0 %v192
    %231 = vmatprep.subr.mxu0 0.0
    %232 = vmatpush1.msra.mxu0 %v193
    %233 = vmatprep.subr.mxu0 0.0
    %234 = vmatpush1.msra.mxu0 0.0
    %235 = vmatprep.subr.mxu0 0.0
    %236 = vmatpush1.msra.mxu0 0.0
    %237 = vmatprep.subr.mxu0 0.0
    %238 = vmatpush1.msra.mxu0 0.0
    %239 = vmatprep.subr.mxu0 0.0
    %240 = vmatpush1.msra.mxu0 0.0
    %241 = vmatprep.subr.mxu0 0.0
    %242 = vmatpush1.msra.mxu0 0.0
    %243 = vmatprep.subr.mxu0 0.0
    %244 = vmatpush1.msra.mxu0 0.0
    %245 = vmatprep.subr.mxu0 0.0
    %246 = vmatpush1.msra.mxu0 0.0
    %247 = vmatprep.subr.mxu0 0.0
    %248 = vmatpush1.msra.mxu0 0.0
    %249 = vmatprep.subr.mxu0 0.0
    %250 = vmatpush1.msra.mxu0 0.0
    %251 = vmatprep.subr.mxu0 0.0
    %252 = vmatpush1.msra.mxu0 0.0
    %253 = vmatprep.subr.mxu0 0.0
    %254 = vmatpush1.msra.mxu0 0.0
    %255 = vmatprep.subr.mxu0 0.0
    %256 = vmatpush1.msra.mxu0 0.0
    %257 = vmatprep.subr.mxu0 0.0
    %258 = vmatpush1.msra.mxu0 0.0
    %259 = vmatprep.subr.mxu0 0.0
    %260 = vmatpush1.msra.mxu0 0.0
    %261 = vmatprep.subr.mxu0 0.0
    %262 = vmatpush1.msra.mxu0 0.0
    %263 = vmatprep.subr.mxu0 0.0
    %264 = vmatpush1.msra.mxu0 0.0
    %265 = vmatprep.mubr.f32.mxu0 0.0
    %266 = vmatmul.mubr.f32.gmra.mrb[0].mxu0 %v174
    %v267 = vpop.f32.mrb[0].mxu0
    %v268 = vadd.f32 %v199, %v267
    %v269 = vpop.f32.mrb[0].mxu0
    %270 = vmatprep.mubr.f32.mxu0 0.0
    %271 = vmatmul.mubr.f32.gmra.mrb[0].mxu0 %v175
    %v272 = vpop.f32.mrb[0].mxu0
    %v273 = vadd.f32 %v199, %v272
    %v274 = vpop.f32.mrb[0].mxu0
    %275 = vmatprep.mubr.f32.mxu0 0.0
    %276 = vmatmul.mubr.f32.gmra.mrb[0].mxu0 %v176
    %v277 = vpop.f32.mrb[0].mxu0
    %v278 = vadd.f32 %v199, %v277
    %v279 = vpop.f32.mrb[0].mxu0
    %280 = vmatprep.mubr.f32.mxu0 0.0
    %281 = vmatmul.mubr.f32.gmra.mrb[0].mxu0 %v177
    %v282 = vpop.f32.mrb[0].mxu0
    %v283 = vadd.f32 %v199, %v282
    %v284 = vpop.f32.mrb[0].mxu0
    %285 = vdwg.mxu0
    %v286 = vmax.f32 %v268, 0.0
    %v287 = vmax.f32 %v273, 0.0
    %v288 = vmax.f32 %v278, 0.0
    %v289 = vmax.f32 %v283, 0.0
    %290 = vst [vmem:[#allocation8] sm:$0xff] %v286
    %291 = vst [vmem:[#allocation8 + $0x8] sm:$0xff] %v287
    %292 = vst [vmem:[#allocation8 + $0x10] sm:$0xff] %v288
    %293 = vst [vmem:[#allocation8 + $0x18] sm:$0xff] %v289
    // Predicated region
    $region34: #{tpu_custom_call.1} parent=1 // pred_check
      _
    $region35: #{tpu_custom_call.1} parent=1 // pred_check_branch
      %295 = sbr.rel (0) target = $region37
    $region36: #{tpu_custom_call.1} parent=1 // pred_region
      %s297 = ssub.s32 512, 512
      %298 = vsyncadd [#allocation4], %s297
      %s299 = sshll.u32 [#allocation8], 4
      %s300 = int_to_ptr.vmem [resolvable:$true] %s299
      %305 = dma.vmem_to_hbm [thread:$0]  %s300, 512, %s5, [#allocation4], 128, 128, 8
    $region37: #{tpu_custom_call.1} parent=1 // pred_fallthru
      _
    // Predicated region
    $region38: #{tpu_custom_call.1} parent=1 // pred_check
      _
    $region39: #{tpu_custom_call.1} parent=1 // pred_check_branch
      %307 = sbr.rel (0) target = $region41
    $region40: #{tpu_custom_call.1} parent=1 // pred_region
      %308 = dma.done [#allocation4], 512
    $region41: #{tpu_custom_call.1} parent=1 // pred_fallthru
      _
    %309 = vsyncpa [#allocation3], 1
    %310 = vsyncpa [#allocation6], 1
    %311 = vsyncpa [#allocation4], 1

</llo_original>
